<compile_context>
chip_gen: v5e
topology: v5e:2x2
jax: 0.10.0
libtpu: 0.0.40
codegen_flags: <defaults>
</compile_context>

<pallas_src>
import jax
import jax.numpy as jnp
from jax.experimental import pallas as pl
from jax.experimental.pallas import tpu as pltpu


def _round_up(n, m):
    return ((n + m - 1) // m) * m


def densemos_kernel(x_ref, w1_ref, b1_ref, w2_ref, b2_ref, w3_ref, b3_ref,
                    o_ref):
    # x_ref:  (TILE_B, L*D) f32 (source dtype)   w1_ref: (L*D, HP) bf16
    # b1/b2:  (1, HP) f32                        w2_ref: (HP, HP) bf16
    # w3_ref: (1, HP) f32                        b3_ref: (1, 1) f32 in SMEM
    # Cast to bf16 for the MXU *inside* the kernel (hidden under the x DMA).
    x = x_ref[...].astype(jnp.bfloat16)

    # layer1: weighted-average folded into W1  -> one K=L*D matmul, f32 acc.
    h1 = jnp.dot(x, w1_ref[...], preferred_element_type=jnp.float32)
    h1 = jnp.maximum(h1 + b1_ref[...], 0.0)            # (TILE_B, HP) f32

    # layer2: Linear + ReLU (bf16 MXU operands, f32 accumulation).
    h2 = jnp.dot(h1.astype(w2_ref.dtype), w2_ref[...],
                 preferred_element_type=jnp.float32)
    h2 = jnp.maximum(h2 + b2_ref[...], 0.0)             # (TILE_B, HP) f32

    # output_layer: N=1 matmul -> VPU multiply + lane reduction (MXU-free).
    out = jnp.sum(h2 * w3_ref[...], axis=-1, keepdims=True) + b3_ref[0, 0]
    o_ref[...] = out                                     # (TILE_B, 1) f32


def densemos_forward(x, layer_w, w1, b1, w2, b2, w3, b3, *,
                     tile_b=2048, batch_dim_semantics="parallel"):
    # batch_dim_semantics: pass pltpu.CORE_PARALLEL on v7x if xprof shows one
    # idle TensorCore (no effect on v5e/v6e, which have a single TC).
    B, L, D = x.shape
    Din, H = w1.shape
    assert Din == D
    K = L * D                              # 12 * 32 = 384, lane-dense
    HP = _round_up(H, 128)                 # hidden padded to 128 lanes

    # ---- wrapper-side parameter prep (tiny, batch-independent) ----
    sw = jax.nn.softmax(layer_w.reshape(-1).astype(jnp.float32), axis=0)  # (L,)
    w1_eff = (sw[:, None, None] * w1[None, :, :]).reshape(K, H)           # (K, H)

    w1p = jnp.zeros((K, HP), jnp.float32).at[:, :H].set(w1_eff)
    w2p = jnp.zeros((HP, HP), jnp.float32).at[:H, :H].set(w2)
    b1p = jnp.zeros((1, HP), jnp.float32).at[:, :H].set(b1.reshape(1, H))
    b2p = jnp.zeros((1, HP), jnp.float32).at[:, :H].set(b2.reshape(1, H))
    w3p = jnp.zeros((1, HP), jnp.float32).at[:, :H].set(w3.reshape(1, H))
    b3s = b3.reshape(1, 1).astype(jnp.float32)

    w1p = w1p.astype(jnp.bfloat16)
    w2p = w2p.astype(jnp.bfloat16)

    # ---- activation layout: (B, L, D) -> (B, L*D), SOURCE dtype, no cast ----
    x2 = x.reshape(B, K)                   # contiguous reshape: no HBM pass

    B_eff = B
    if B % 8 != 0:
        # Pad only to the sublane multiple (<= 7 rows).  This keeps tiny /
        # ragged batches trivially legal and is negligible vs. the removed
        # full astype+pad pass over x.
        B_eff = _round_up(B, 8)
        x2 = jnp.pad(x2, ((0, B_eff - B), (0, 0)))

    tile_b = max(8, min(_round_up(tile_b, 8), B_eff))
    num_tiles = pl.cdiv(B_eff, tile_b)     # ragged last tile = partial block

    resident = dict(pipeline_mode=pl.Buffered(1))   # constant index_map ops

    out = pl.pallas_call(
        densemos_kernel,
        out_shape=jax.ShapeDtypeStruct((B_eff, 1), jnp.float32),
        grid=(num_tiles,),
        in_specs=[
            pl.BlockSpec((tile_b, K), lambda i: (i, 0)),            # x tile (pipelined)
            pl.BlockSpec((K, HP), lambda i: (0, 0), **resident),    # W1_eff
            pl.BlockSpec((1, HP), lambda i: (0, 0), **resident),    # b1
            pl.BlockSpec((HP, HP), lambda i: (0, 0), **resident),   # W2
            pl.BlockSpec((1, HP), lambda i: (0, 0), **resident),    # b2
            pl.BlockSpec((1, HP), lambda i: (0, 0), **resident),    # W3 as a row
            pl.BlockSpec(memory_space=pltpu.MemorySpace.SMEM),      # b3 scalar
        ],
        out_specs=pl.BlockSpec((tile_b, 1), lambda i: (i, 0)),
        compiler_params=pltpu.CompilerParams(
            dimension_semantics=(batch_dim_semantics,),
            vmem_limit_bytes=32 * 1024 * 1024,   # safe on v5e/v6e/v7x; fits tile_b<=4096
        ),
    )(x2, w1p, b1p, w2p, b2p, w3p, b3s)

    return out[:B]


def init_params(key, input_dim, hidden_dim, num_layers):
    k1, k2, k3, k4, k5, k6 = jax.random.split(key, 6)
    # WeightedAverage weights initialized to ones, as in the PyTorch module.
    layer_w = jnp.ones((1, num_layers), jnp.float32)
    w1 = jax.random.normal(k1, (input_dim, hidden_dim), jnp.float32) * 0.1
    b1 = jax.random.normal(k2, (1, hidden_dim), jnp.float32) * 0.1
    w2 = jax.random.normal(k3, (hidden_dim, hidden_dim), jnp.float32) * 0.1
    b2 = jax.random.normal(k4, (1, hidden_dim), jnp.float32) * 0.1
    w3 = jax.random.normal(k5, (hidden_dim, 1), jnp.float32) * 0.1
    b3 = jax.random.normal(k6, (1, 1), jnp.float32) * 0.1
    return layer_w, w1, b1, w2, b2, w3, b3


def reference_forward(x, layer_w, w1, b1, w2, b2, w3, b3):
    # Pure-JAX f32 reference matching the PyTorch semantics (eval mode).
    w = jax.nn.softmax(layer_w.reshape(-1), axis=0)
    xa = jnp.sum(x * w[None, :, None], axis=1)
    h1 = jax.nn.relu(xa @ w1 + b1)
    h2 = jax.nn.relu(h1 @ w2 + b2)
    return h2 @ w3 + b3


if __name__ == "__main__":
    # Small shapes consistent with the module: (batch, num_layers, input_dim)
    B, L, D, H = 2, 12, 32, 32
    key = jax.random.PRNGKey(0)
    kx, kp = jax.random.split(key)
    x = jax.random.normal(kx, (B, L, D), jnp.float32)
    params = init_params(kp, D, H, L)

    fwd = jax.jit(densemos_forward)
    out = fwd(x, *params)
    out = jax.block_until_ready(out)

    ref = reference_forward(x, *params)
    assert out.shape == (B, 1)
    # bf16 MXU operands (f32 accumulation) -> relaxed tolerance vs f32 reference.
    assert jnp.allclose(out, ref, atol=3e-2, rtol=3e-2)
    print("KERNEL_OK")
</pallas_src>

<mosaic_0001>
module attributes {stable_mosaic.version = 11 : i64} {
  func.func @densemos_kernel(%arg0: i32, %arg1: memref<8x384xf32, #tpu.memory_space<vmem>>, %arg2: memref<384x128xbf16, #tpu.memory_space<vmem>>, %arg3: memref<1x128xf32, #tpu.memory_space<vmem>>, %arg4: memref<128x128xbf16, #tpu.memory_space<vmem>>, %arg5: memref<1x128xf32, #tpu.memory_space<vmem>>, %arg6: memref<1x128xf32, #tpu.memory_space<vmem>>, %arg7: memref<1x1xf32, #tpu.memory_space<smem>>, %arg8: memref<8x1xf32, #tpu.memory_space<vmem>>) attributes {dimension_semantics = [#tpu.dimension_semantics<parallel>], iteration_bounds = array<i64: 1>, scalar_prefetch = 0 : i64, scratch_operands = 0 : i64, tpu.core_type = #tpu.core_type<tc>, window_params = [{transform_indices = @transform_0, window_bounds = array<i64: 8, 384>}, {pipeline_mode = #tpu.pipeline_mode<synchronous>, transform_indices = @transform_1, window_bounds = array<i64: 384, 128>}, {pipeline_mode = #tpu.pipeline_mode<synchronous>, transform_indices = @transform_2, window_bounds = array<i64: 1, 128>}, {pipeline_mode = #tpu.pipeline_mode<synchronous>, transform_indices = @transform_3, window_bounds = array<i64: 128, 128>}, {pipeline_mode = #tpu.pipeline_mode<synchronous>, transform_indices = @transform_4, window_bounds = array<i64: 1, 128>}, {pipeline_mode = #tpu.pipeline_mode<synchronous>, transform_indices = @transform_5, window_bounds = array<i64: 1, 128>}, {transform_indices = @transform_6, window_bounds = array<i64: 1, 1>}, {transform_indices = @transform_7, window_bounds = array<i64: 8, 1>}]} {
    %c0 = arith.constant 0 : index
    %c0_0 = arith.constant 0 : index
    %0 = vector.load %arg1[%c0, %c0_0] : memref<8x384xf32, #tpu.memory_space<vmem>>, vector<8x384xf32>
    %1 = arith.truncf %0 : vector<8x384xf32> to vector<8x384xbf16>
    %c0_1 = arith.constant 0 : index
    %c0_2 = arith.constant 0 : index
    %2 = vector.load %arg2[%c0_1, %c0_2] : memref<384x128xbf16, #tpu.memory_space<vmem>>, vector<384x128xbf16>
    %cst = arith.constant dense<0.000000e+00> : vector<8x128xf32>
    %3 = tpu.matmul %1, %2, %cst {dimension_numbers = #tpu.dot_dimension_numbers<[1], [0], [0], [1], [0, 0, 1, 1], [], []>} : vector<8x384xbf16>, vector<384x128xbf16>, vector<8x128xf32> -> vector<8x128xf32>
    %c0_3 = arith.constant 0 : index
    %c0_4 = arith.constant 0 : index
    %4 = vector.load %arg3[%c0_3, %c0_4] : memref<1x128xf32, #tpu.memory_space<vmem>>, vector<1x128xf32>
    %5 = vector.broadcast %4 : vector<1x128xf32> to vector<8x128xf32>
    %6 = arith.addf %3, %5 : vector<8x128xf32>
    %cst_5 = arith.constant 0.000000e+00 : f32
    %7 = vector.broadcast %cst_5 : f32 to vector<8x128xf32>
    %8 = arith.maximumf %6, %7 : vector<8x128xf32>
    %9 = arith.truncf %8 : vector<8x128xf32> to vector<8x128xbf16>
    %c0_6 = arith.constant 0 : index
    %c0_7 = arith.constant 0 : index
    %10 = vector.load %arg4[%c0_6, %c0_7] : memref<128x128xbf16, #tpu.memory_space<vmem>>, vector<128x128xbf16>
    %cst_8 = arith.constant dense<0.000000e+00> : vector<8x128xf32>
    %11 = tpu.matmul %9, %10, %cst_8 {dimension_numbers = #tpu.dot_dimension_numbers<[1], [0], [0], [1], [0, 0, 1, 1], [], []>} : vector<8x128xbf16>, vector<128x128xbf16>, vector<8x128xf32> -> vector<8x128xf32>
    %c0_9 = arith.constant 0 : index
    %c0_10 = arith.constant 0 : index
    %12 = vector.load %arg5[%c0_9, %c0_10] : memref<1x128xf32, #tpu.memory_space<vmem>>, vector<1x128xf32>
    %13 = vector.broadcast %12 : vector<1x128xf32> to vector<8x128xf32>
    %14 = arith.addf %11, %13 : vector<8x128xf32>
    %cst_11 = arith.constant 0.000000e+00 : f32
    %15 = vector.broadcast %cst_11 : f32 to vector<8x128xf32>
    %16 = arith.maximumf %14, %15 : vector<8x128xf32>
    %c0_12 = arith.constant 0 : index
    %c0_13 = arith.constant 0 : index
    %17 = vector.load %arg6[%c0_12, %c0_13] : memref<1x128xf32, #tpu.memory_space<vmem>>, vector<1x128xf32>
    %18 = vector.broadcast %17 : vector<1x128xf32> to vector<8x128xf32>
    %19 = arith.mulf %16, %18 : vector<8x128xf32>
    %cst_14 = arith.constant dense<0.000000e+00> : vector<8xf32>
    %20 = vector.multi_reduction <add>, %19, %cst_14 [1] : vector<8x128xf32> to vector<8xf32>
    %21 = vector.shape_cast %20 : vector<8xf32> to vector<8x1xf32>
    %c0_15 = arith.constant 0 : index
    %c0_16 = arith.constant 0 : index
    %22 = memref.load %arg7[%c0_15, %c0_16] : memref<1x1xf32, #tpu.memory_space<smem>>
    %23 = vector.broadcast %22 : f32 to vector<8x1xf32>
    %24 = arith.addf %21, %23 : vector<8x1xf32>
    %c0_17 = arith.constant 0 : index
    %c0_18 = arith.constant 0 : index
    %25 = vector.load %arg8[%c0_17, %c0_18] : memref<8x1xf32, #tpu.memory_space<vmem>>, vector<8x1xf32>
    tpu.vector_store %arg8[%c0_17, %c0_18], %24 {strides = array<i32>} : memref<8x1xf32, #tpu.memory_space<vmem>>, vector<8x1xf32>,
    return
  }
  func.func @transform_0(%arg0: i32) -> (i32, i32) {
    %c0_i32 = arith.constant 0 : i32
    %c0_i32_0 = arith.constant 0 : i32
    return %arg0, %c0_i32 : i32, i32
  }
  func.func @transform_1(%arg0: i32) -> (i32, i32) {
    %c0_i32 = arith.constant 0 : i32
    %c0_i32_0 = arith.constant 0 : i32
    %c0_i32_1 = arith.constant 0 : i32
    return %c0_i32, %c0_i32_0 : i32, i32
  }
  func.func @transform_2(%arg0: i32) -> (i32, i32) {
    %c0_i32 = arith.constant 0 : i32
    %c0_i32_0 = arith.constant 0 : i32
    %c0_i32_1 = arith.constant 0 : i32
    return %c0_i32, %c0_i32_0 : i32, i32
  }
  func.func @transform_3(%arg0: i32) -> (i32, i32) {
    %c0_i32 = arith.constant 0 : i32
    %c0_i32_0 = arith.constant 0 : i32
    %c0_i32_1 = arith.constant 0 : i32
    return %c0_i32, %c0_i32_0 : i32, i32
  }
  func.func @transform_4(%arg0: i32) -> (i32, i32) {
    %c0_i32 = arith.constant 0 : i32
    %c0_i32_0 = arith.constant 0 : i32
    %c0_i32_1 = arith.constant 0 : i32
    return %c0_i32, %c0_i32_0 : i32, i32
  }
  func.func @transform_5(%arg0: i32) -> (i32, i32) {
    %c0_i32 = arith.constant 0 : i32
    %c0_i32_0 = arith.constant 0 : i32
    %c0_i32_1 = arith.constant 0 : i32
    return %c0_i32, %c0_i32_0 : i32, i32
  }
  func.func @transform_6(%arg0: i32) -> (i32, i32) {
    %c0_i32 = arith.constant 0 : i32
    %c0_i32_0 = arith.constant 0 : i32
    %c0_i32_1 = arith.constant 0 : i32
    return %c0_i32, %c0_i32_0 : i32, i32
  }
  func.func @transform_7(%arg0: i32) -> (i32, i32) {
    %c0_i32 = arith.constant 0 : i32
    %c0_i32_0 = arith.constant 0 : i32
    return %arg0, %c0_i32 : i32, i32
  }
}

</mosaic_0001>

<llo_original>
// kernel: densemos_forward.1
$region0: #{densemos_forward.1}
  #allocation0 [shape = 'u32[]', space=smem, size = 0x4, offset = 0x4, fixed_abs, tag = 'smem constant byte address 0x4 - core index']
  #allocation1 [shape = 'u32[72,128]{1,0:T(1,128)}', space=vmem, size = 0x9000, scoped, tag = 'internal scratch']
  #allocation2 [shape = 'f32[1,1]{1,0:T(1,128)S(6)}', space=smem, size = 0x200, scoped, tag = 'scoped memory for densemos_forward.1']
  %s0 = inlined_call_operand.vmem [shape: f32[8,384], index: 0, kind: input, shape index: {}]
  %s1 = inlined_call_operand.vmem [shape: bf16[384,128], index: 1, kind: input, shape index: {}]
  %s2 = inlined_call_operand.vmem [shape: f32[1,128], index: 2, kind: input, shape index: {}]
  %s3 = inlined_call_operand.vmem [shape: bf16[128,128], index: 3, kind: input, shape index: {}]
  %s4 = inlined_call_operand.vmem [shape: f32[1,128], index: 4, kind: input, shape index: {}]
  %s5 = inlined_call_operand.vmem [shape: f32[1,128], index: 5, kind: input, shape index: {}]
  %s6 = inlined_call_operand.<no memory space> [shape: f32[1,1], index: 6, kind: input, shape index: {}]
  %s7 = inlined_call_operand.vmem [shape: f32[8,1], index: 7, kind: output, shape index: {}]
  %s8 = sld [smem:[#allocation0]]
  $region38: #{densemos_forward.1} parent=0
    _
  %s10 = ssub.s32 1, %s8
  %s11 = scalar_select 0, %s10, %s8
  %12 = sst [smem:[#allocation2]] %s6
  // Predicated region
  $region2: #{densemos_forward.1} parent=0 // pred_check
    _
  $region3: #{densemos_forward.1} parent=0 // pred_check_branch
    %14 = sbr.rel (0) target = $region5
  $region4: #{densemos_forward.1} parent=0 // pred_region
    _
  $region5: #{densemos_forward.1} parent=0 // pred_fallthru
    _
  // Predicated region
  $region6: #{densemos_forward.1} parent=0 // pred_check
    _
  $region7: #{densemos_forward.1} parent=0 // pred_check_branch
    %16 = sbr.rel (0) target = $region9
  $region8: #{densemos_forward.1} parent=0 // pred_region
    _
  $region9: #{densemos_forward.1} parent=0 // pred_fallthru
    _
  // Predicated region
  $region10: #{densemos_forward.1} parent=0 // pred_check
    _
  $region11: #{densemos_forward.1} parent=0 // pred_check_branch
    %18 = sbr.rel (0) target = $region13
  $region12: #{densemos_forward.1} parent=0 // pred_region
    _
  $region13: #{densemos_forward.1} parent=0 // pred_fallthru
    _
  // Predicated region
  $region14: #{densemos_forward.1} parent=0 // pred_check
    _
  $region15: #{densemos_forward.1} parent=0 // pred_check_branch
    %20 = sbr.rel (0) target = $region17
  $region16: #{densemos_forward.1} parent=0 // pred_region
    _
  $region17: #{densemos_forward.1} parent=0 // pred_fallthru
    _
  // Predicated region
  $region18: #{densemos_forward.1} parent=0 // pred_check
    _
  $region19: #{densemos_forward.1} parent=0 // pred_check_branch
    %22 = sbr.rel (0) target = $region21
  $region20: #{densemos_forward.1} parent=0 // pred_region
    _
  $region21: #{densemos_forward.1} parent=0 // pred_fallthru
    _
  // Predicated region
  $region22: #{densemos_forward.1} parent=0 // pred_check
    _
  $region23: #{densemos_forward.1} parent=0 // pred_check_branch
    %24 = sbr.rel (0) target = $region25
  $region24: #{densemos_forward.1} parent=0 // pred_region
    _
  $region25: #{densemos_forward.1} parent=0 // pred_fallthru
    _
  // Predicated region
  $region26: #{densemos_forward.1} parent=0 // pred_check
    _
  $region27: #{densemos_forward.1} parent=0 // pred_check_branch
    %26 = sbr.rel (0) target = $region29
  $region28: #{densemos_forward.1} parent=0 // pred_region
    _
  $region29: #{densemos_forward.1} parent=0 // pred_fallthru
    _
  %v27 = vld [vmem:[%s0] sm:$0xff]
  %v28 = vld [vmem:[%s0 + $0x8] sm:$0xff]
  %v29 = vld [vmem:[%s0 + $0x10] sm:$0xff]
  %v30 = vpack.c.bf16 %v27, %v27
  %v31 = vpack.c.bf16 %v28, %v28
  %v32 = vpack.c.bf16 %v29, %v29
  %v33 = vld [vmem:[%s1] sm:$0xf]
  %v34 = vld [vmem:[%s1 + $0x4] sm:$0xf]
  %v35 = vld [vmem:[%s1 + $0x8] sm:$0xf]
  %v36 = vld [vmem:[%s1 + $0xc] sm:$0xf]
  %v37 = vld [vmem:[%s1 + $0x10] sm:$0xf]
  %v38 = vld [vmem:[%s1 + $0x14] sm:$0xf]
  %v39 = vld [vmem:[%s1 + $0x18] sm:$0xf]
  %v40 = vld [vmem:[%s1 + $0x1c] sm:$0xf]
  %v41 = vld [vmem:[%s1 + $0x20] sm:$0xf]
  %v42 = vld [vmem:[%s1 + $0x24] sm:$0xf]
  %v43 = vld [vmem:[%s1 + $0x28] sm:$0xf]
  %v44 = vld [vmem:[%s1 + $0x2c] sm:$0xf]
  %v45 = vld [vmem:[%s1 + $0x30] sm:$0xf]
  %v46 = vld [vmem:[%s1 + $0x34] sm:$0xf]
  %v47 = vld [vmem:[%s1 + $0x38] sm:$0xf]
  %v48 = vld [vmem:[%s1 + $0x3c] sm:$0xf]
  %v49 = vld [vmem:[%s1 + $0x40] sm:$0xf]
  %v50 = vld [vmem:[%s1 + $0x44] sm:$0xf]
  %v51 = vld [vmem:[%s1 + $0x48] sm:$0xf]
  %v52 = vld [vmem:[%s1 + $0x4c] sm:$0xf]
  %v53 = vld [vmem:[%s1 + $0x50] sm:$0xf]
  %v54 = vld [vmem:[%s1 + $0x54] sm:$0xf]
  %v55 = vld [vmem:[%s1 + $0x58] sm:$0xf]
  %v56 = vld [vmem:[%s1 + $0x5c] sm:$0xf]
  %v57 = vld [vmem:[%s1 + $0x60] sm:$0xf]
  %v58 = vld [vmem:[%s1 + $0x64] sm:$0xf]
  %v59 = vld [vmem:[%s1 + $0x68] sm:$0xf]
  %v60 = vld [vmem:[%s1 + $0x6c] sm:$0xf]
  %v61 = vld [vmem:[%s1 + $0x70] sm:$0xf]
  %v62 = vld [vmem:[%s1 + $0x74] sm:$0xf]
  %v63 = vld [vmem:[%s1 + $0x78] sm:$0xf]
  %v64 = vld [vmem:[%s1 + $0x7c] sm:$0xf]
  %v65 = vld [vmem:[%s1 + $0x80] sm:$0xf]
  %v66 = vld [vmem:[%s1 + $0x84] sm:$0xf]
  %v67 = vld [vmem:[%s1 + $0x88] sm:$0xf]
  %v68 = vld [vmem:[%s1 + $0x8c] sm:$0xf]
  %v69 = vld [vmem:[%s1 + $0x90] sm:$0xf]
  %v70 = vld [vmem:[%s1 + $0x94] sm:$0xf]
  %v71 = vld [vmem:[%s1 + $0x98] sm:$0xf]
  %v72 = vld [vmem:[%s1 + $0x9c] sm:$0xf]
  %v73 = vld [vmem:[%s1 + $0xa0] sm:$0xf]
  %v74 = vld [vmem:[%s1 + $0xa4] sm:$0xf]
  %v75 = vld [vmem:[%s1 + $0xa8] sm:$0xf]
  %v76 = vld [vmem:[%s1 + $0xac] sm:$0xf]
  %v77 = vld [vmem:[%s1 + $0xb0] sm:$0xf]
  %v78 = vld [vmem:[%s1 + $0xb4] sm:$0xf]
  %v79 = vld [vmem:[%s1 + $0xb8] sm:$0xf]
  %v80 = vld [vmem:[%s1 + $0xbc] sm:$0xf]
  %v81 = vld [vmem:[%s2] sm:$0x1]
  %v83 = vperm.slane %v81, 0
  %v133 = vunpack.c.l.b16 %v33
  %v134 = vunpack.c.l.b16 %v34
  %v135 = vunpack.c.l.b16 %v35
  %v136 = vunpack.c.l.b16 %v36
  %v137 = vunpack.c.l.b16 %v37
  %v138 = vunpack.c.l.b16 %v38
  %v139 = vunpack.c.l.b16 %v39
  %v140 = vunpack.c.l.b16 %v40
  %v141 = vunpack.c.l.b16 %v41
  %v142 = vunpack.c.l.b16 %v42
  %v143 = vunpack.c.l.b16 %v43
  %v144 = vunpack.c.l.b16 %v44
  %v145 = vunpack.c.l.b16 %v45
  %v146 = vunpack.c.l.b16 %v46
  %v147 = vunpack.c.l.b16 %v47
  %v148 = vunpack.c.l.b16 %v48
  %v149 = vunpack.c.l.b16 %v49
  %v150 = vunpack.c.l.b16 %v50
  %v151 = vunpack.c.l.b16 %v51
  %v152 = vunpack.c.l.b16 %v52
  %v153 = vunpack.c.l.b16 %v53
  %v154 = vunpack.c.l.b16 %v54
  %v155 = vunpack.c.l.b16 %v55
  %v156 = vunpack.c.l.b16 %v56
  %v157 = vunpack.c.l.b16 %v57
  %v158 = vunpack.c.l.b16 %v58
  %v159 = vunpack.c.l.b16 %v59
  %v160 = vunpack.c.l.b16 %v60
  %v161 = vunpack.c.l.b16 %v61
  %v162 = vunpack.c.l.b16 %v62
  %v163 = vunpack.c.l.b16 %v63
  %v164 = vunpack.c.l.b16 %v64
  %v165 = vunpack.c.l.b16 %v65
  %v166 = vunpack.c.l.b16 %v66
  %v167 = vunpack.c.l.b16 %v67
  %v168 = vunpack.c.l.b16 %v68
  %v169 = vunpack.c.l.b16 %v69
  %v170 = vunpack.c.l.b16 %v70
  %v171 = vunpack.c.l.b16 %v71
  %v172 = vunpack.c.l.b16 %v72
  %v173 = vunpack.c.l.b16 %v73
  %v174 = vunpack.c.l.b16 %v74
  %v175 = vunpack.c.l.b16 %v75
  %v176 = vunpack.c.l.b16 %v76
  %v177 = vunpack.c.l.b16 %v77
  %v178 = vunpack.c.l.b16 %v78
  %v179 = vunpack.c.l.b16 %v79
  %v180 = vunpack.c.l.b16 %v80
  %v181 = vpack.c.b16 %v134, %v133
  %v182 = vpack.c.b16 %v136, %v135
  %v183 = vpack.c.b16 %v138, %v137
  %v184 = vpack.c.b16 %v140, %v139
  %v185 = vpack.c.b16 %v142, %v141
  %v186 = vpack.c.b16 %v144, %v143
  %v187 = vpack.c.b16 %v146, %v145
  %v188 = vpack.c.b16 %v148, %v147
  %v189 = vpack.c.b16 %v150, %v149
  %v190 = vpack.c.b16 %v152, %v151
  %v191 = vpack.c.b16 %v154, %v153
  %v192 = vpack.c.b16 %v156, %v155
  %v193 = vpack.c.b16 %v158, %v157
  %v194 = vpack.c.b16 %v160, %v159
  %v195 = vpack.c.b16 %v162, %v161
  %v196 = vpack.c.b16 %v164, %v163
  %v197 = vpack.c.b16 %v166, %v165
  %v198 = vpack.c.b16 %v168, %v167
  %v199 = vpack.c.b16 %v170, %v169
  %v200 = vpack.c.b16 %v172, %v171
  %v201 = vpack.c.b16 %v174, %v173
  %v202 = vpack.c.b16 %v176, %v175
  %v203 = vpack.c.b16 %v178, %v177
  %v204 = vpack.c.b16 %v180, %v179
  %229 = vmatpush.bf16.msra.mxu0 %v188
  %230 = vmatpush.bf16.msra.mxu0 %v187
  %231 = vmatpush.bf16.msra.mxu0 %v186
  %232 = vmatpush.bf16.msra.mxu0 %v185
  %233 = vmatpush.bf16.msra.mxu0 %v184
  %234 = vmatpush.bf16.msra.mxu0 %v183
  %235 = vmatpush.bf16.msra.mxu0 %v182
  %236 = vmatpush.bf16.msra.mxu0 %v181
  %237 = vmatmul.bf16.gmra.mxu0 %v30
  %v238 = vpop.f32.mrf.mxu0
  %v239 = vadd.f32 %v83, %v238
  %v240 = vpop.f32.mrf.mxu0
  %241 = vdwg.mxu0
  %242 = vmatpush.bf16.msra.mxu0 %v196
  %243 = vmatpush.bf16.msra.mxu0 %v195
  %244 = vmatpush.bf16.msra.mxu0 %v194
  %245 = vmatpush.bf16.msra.mxu0 %v193
  %246 = vmatpush.bf16.msra.mxu0 %v192
  %247 = vmatpush.bf16.msra.mxu0 %v191
  %248 = vmatpush.bf16.msra.mxu0 %v190
  %249 = vmatpush.bf16.msra.mxu0 %v189
  %250 = vmatmul.bf16.gmra.mxu0 %v31
  %v251 = vpop.f32.mrf.mxu0
  %v252 = vadd.f32 %v239, %v251
  %v253 = vpop.f32.mrf.mxu0
  %254 = vdwg.mxu0
  %255 = vmatpush.bf16.msra.mxu0 %v204
  %256 = vmatpush.bf16.msra.mxu0 %v203
  %257 = vmatpush.bf16.msra.mxu0 %v202
  %258 = vmatpush.bf16.msra.mxu0 %v201
  %259 = vmatpush.bf16.msra.mxu0 %v200
  %260 = vmatpush.bf16.msra.mxu0 %v199
  %261 = vmatpush.bf16.msra.mxu0 %v198
  %262 = vmatpush.bf16.msra.mxu0 %v197
  %263 = vmatmul.bf16.gmra.mxu0 %v32
  %v264 = vpop.f32.mrf.mxu0
  %v265 = vadd.f32 %v252, %v264
  %v266 = vpop.f32.mrf.mxu0
  %267 = vdwg.mxu0
  %v268 = vmax.f32 %v265, 0.0
  %v269 = vpack.c.bf16 %v268, %v268
  %v270 = vld [vmem:[%s3] sm:$0xf]
  %v271 = vld [vmem:[%s3 + $0x4] sm:$0xf]
  %v272 = vld [vmem:[%s3 + $0x8] sm:$0xf]
  %v273 = vld [vmem:[%s3 + $0xc] sm:$0xf]
  %v274 = vld [vmem:[%s3 + $0x10] sm:$0xf]
  %v275 = vld [vmem:[%s3 + $0x14] sm:$0xf]
  %v276 = vld [vmem:[%s3 + $0x18] sm:$0xf]
  %v277 = vld [vmem:[%s3 + $0x1c] sm:$0xf]
  %v278 = vld [vmem:[%s3 + $0x20] sm:$0xf]
  %v279 = vld [vmem:[%s3 + $0x24] sm:$0xf]
  %v280 = vld [vmem:[%s3 + $0x28] sm:$0xf]
  %v281 = vld [vmem:[%s3 + $0x2c] sm:$0xf]
  %v282 = vld [vmem:[%s3 + $0x30] sm:$0xf]
  %v283 = vld [vmem:[%s3 + $0x34] sm:$0xf]
  %v284 = vld [vmem:[%s3 + $0x38] sm:$0xf]
  %v285 = vld [vmem:[%s3 + $0x3c] sm:$0xf]
  %v286 = vld [vmem:[%s4] sm:$0x1]
  %v288 = vperm.slane %v286, 0
  %v306 = vunpack.c.l.b16 %v270
  %v307 = vunpack.c.l.b16 %v271
  %v308 = vunpack.c.l.b16 %v272
  %v309 = vunpack.c.l.b16 %v273
  %v310 = vunpack.c.l.b16 %v274
  %v311 = vunpack.c.l.b16 %v275
  %v312 = vunpack.c.l.b16 %v276
  %v313 = vunpack.c.l.b16 %v277
  %v314 = vunpack.c.l.b16 %v278
  %v315 = vunpack.c.l.b16 %v279
  %v316 = vunpack.c.l.b16 %v280
  %v317 = vunpack.c.l.b16 %v281
  %v318 = vunpack.c.l.b16 %v282
  %v319 = vunpack.c.l.b16 %v283
  %v320 = vunpack.c.l.b16 %v284
  %v321 = vunpack.c.l.b16 %v285
  %v322 = vpack.c.b16 %v307, %v306
  %v323 = vpack.c.b16 %v309, %v308
  %v324 = vpack.c.b16 %v311, %v310
  %v325 = vpack.c.b16 %v313, %v312
  %v326 = vpack.c.b16 %v315, %v314
  %v327 = vpack.c.b16 %v317, %v316
  %v328 = vpack.c.b16 %v319, %v318
  %v329 = vpack.c.b16 %v321, %v320
  %338 = vmatpush.bf16.msra.mxu0 %v329
  %339 = vmatpush.bf16.msra.mxu0 %v328
  %340 = vmatpush.bf16.msra.mxu0 %v327
  %341 = vmatpush.bf16.msra.mxu0 %v326
  %342 = vmatpush.bf16.msra.mxu0 %v325
  %343 = vmatpush.bf16.msra.mxu0 %v324
  %344 = vmatpush.bf16.msra.mxu0 %v323
  %345 = vmatpush.bf16.msra.mxu0 %v322
  %346 = vmatmul.bf16.gmra.mxu0 %v269
  %v347 = vpop.f32.mrf.mxu0
  %v348 = vadd.f32 %v288, %v347
  %v349 = vpop.f32.mrf.mxu0
  %350 = vdwg.mxu0
  %v351 = vmax.f32 %v348, 0.0
  %v352 = vld [vmem:[%s5] sm:$0x1]
  %v354 = vperm.slane %v352, 0
  %v356 = vmul.f32 %v351, %v354
  %357 = vadd.xlane.f32.xlu0 %v356
  %v358 = vpop.xlane.xlu0 %357
  %s359 = sld [smem:[#allocation2]]
  %v360 = vstv %s359
  %v361 = vadd.f32 %v358, %v360
  %vm362 = vcmask 7168
  %363 = vst.msk [vmem:[%s7] sm:$0xff] %vm362, %v361
  // Predicated region
  $region30: #{densemos_forward.1} parent=0 // pred_check
    _
  $region31: #{densemos_forward.1} parent=0 // pred_check_branch
    %365 = sbr.rel (0) target = $region33
  $region32: #{densemos_forward.1} parent=0 // pred_region
    _
  $region33: #{densemos_forward.1} parent=0 // pred_fallthru
    _
  // Predicated region
  $region34: #{densemos_forward.1} parent=0 // pred_check
    _
  $region35: #{densemos_forward.1} parent=0 // pred_check_branch
    %367 = sbr.rel (0) target = $region37
  $region36: #{densemos_forward.1} parent=0 // pred_region
    _
  $region37: #{densemos_forward.1} parent=0 // pred_fallthru
    _

</llo_original>
